<compile_context>
chip_gen: v7x
topology: tpu7x:2x2x1
jax: 0.10.0
libtpu: 0.0.40
codegen_flags: <defaults>
</compile_context>

<pallas_src>
import functools

import jax
import jax.numpy as jnp
from jax.experimental import pallas as pl
from jax.experimental.pallas import tpu as pltpu

LANE = 128       # vreg lane width: pad feature dims to this for lane-dense stores
SUBLANE = 8      # vreg sublane width: pad batch to this
MASK_NEG = -1e30  # softmax padded-lane sentinel (f32-safe: exp underflows to 0)

# Default batch tile. (512, 128) f32 tiles double-buffered plus all resident
# padded weights are well under v7x's 32 MiB scoped VMEM, so the same tile is
# safe on v5e/v6e/v7x.
DEFAULT_TILE_B = 512


def _round_up(n, m):
    return ((n + m - 1) // m) * m


def _fused_mlp_kernel(x_ref, *rest, layertypes):
    """Fused MLP on one batch tile: h = x; for each layer h = act(h @ W + b).

    rest = (w0, b0, w1, b1, ..., o_ref). All tensors arrive padded:
      activations (TILE_B, F_pad) f32, weights (K_pad, N_pad) bf16,
      biases (1, N_pad) f32.
    Padded weight entries are zero; padded bias lanes are 0 for relu layers
    and -1e30 for softmax layers (so they never win the max and exp -> 0).
    """
    o_ref = rest[-1]
    param_refs = rest[:-1]

    h = x_ref[...]                                       # (TILE_B, F0_pad) f32
    for i, act in enumerate(layertypes):
        w = param_refs[2 * i][...]                       # (K_pad, N_pad) bf16
        b = param_refs[2 * i + 1][...]                   # (1, N_pad) f32
        # bf16 operands on the MXU, f32 accumulation; bias broadcast over rows.
        y = jnp.dot(h.astype(w.dtype), w, preferred_element_type=jnp.float32) + b

        if act == "relu":
            h = jnp.maximum(y, 0.0)
        elif act == "softmax":
            # Padded lanes carry the -1e30 bias sentinel: they lose the max and
            # their exp underflows to exactly 0, so the row sum is already
            # correct. Exact division keeps row sums == 1 to float rounding.
            m = jnp.max(y, axis=1, keepdims=True)
            e = jnp.exp(y - m)
            s = jnp.sum(e, axis=1, keepdims=True)
            h = e / s
        else:
            raise ValueError(f"unsupported layer type: {act}")

    o_ref[...] = h                                       # lane-dense f32 store


def prepare_net_params(params, layertypes):
    """One-time parameter prep (do NOT call per forward):

    * pad every (W, b) up to vreg-aligned shapes (features -> multiples of 128)
    * cast W to bf16 (MXU operands), keep b in f32
    * bake the softmax lane mask into the padded bias lanes (-1e30)

    Returns (flat_params, sizes, pad_sizes).
    """
    sizes = [params[0][0].shape[0]] + [w.shape[1] for w, _ in params]
    pad_sizes = [_round_up(n, LANE) for n in sizes]

    flat_params = []
    for i, ((w, b), act) in enumerate(zip(params, layertypes)):
        k, n = w.shape
        w_p = jnp.pad(
            w.astype(jnp.float32),
            ((0, pad_sizes[i] - k), (0, pad_sizes[i + 1] - n)),
        ).astype(jnp.bfloat16)
        pad_val = MASK_NEG if act == "softmax" else 0.0
        b_p = jnp.pad(
            b.astype(jnp.float32),
            (0, pad_sizes[i + 1] - n),
            constant_values=pad_val,
        ).reshape(1, pad_sizes[i + 1])
        flat_params += [w_p, b_p]

    return tuple(flat_params), tuple(sizes), tuple(pad_sizes)


def build_net_forward(layertypes, sizes, pad_sizes, tile_b=DEFAULT_TILE_B):
    """Returns a jitted forward(x, *flat_params) equivalent to Net.forward."""
    layertypes = tuple(layertypes)
    n_layers = len(layertypes)
    kernel = functools.partial(_fused_mlp_kernel, layertypes=layertypes)

    # Advisory cost estimate so XLA doesn't treat the custom call as opaque
    # (computed per call below since flops scale with batch).
    def _cost(b_pad):
        flops = 0
        transcendentals = 0
        bytes_accessed = 4 * b_pad * (pad_sizes[0] + pad_sizes[-1])
        for i, lt in enumerate(layertypes):
            flops += 2 * b_pad * pad_sizes[i] * pad_sizes[i + 1]
            bytes_accessed += 2 * pad_sizes[i] * pad_sizes[i + 1]   # bf16 W
            bytes_accessed += 4 * pad_sizes[i + 1]                  # f32 b
            if lt == "softmax":
                transcendentals += b_pad * pad_sizes[i + 1]
        return pl.CostEstimate(
            flops=flops, transcendentals=transcendentals,
            bytes_accessed=bytes_accessed)

    @jax.jit
    def forward(x, *flat_params):
        B = x.shape[0]
        # Batch tile: full (padded) batch for small B, otherwise tile_b rows.
        TILE_B = min(tile_b, _round_up(B, SUBLANE))
        B_pad = _round_up(B, TILE_B)

        # Only the activations are padded per call; params were padded once.
        x_p = jnp.pad(
            x.astype(jnp.float32),
            ((0, B_pad - B), (0, pad_sizes[0] - sizes[0])),
        )

        in_specs = [pl.BlockSpec((TILE_B, pad_sizes[0]), lambda i: (i, 0))]
        for li in range(n_layers):
            # Constant index_map -> weights/biases stay resident in VMEM
            # across batch tiles (no re-DMA per grid step).
            in_specs.append(
                pl.BlockSpec((pad_sizes[li], pad_sizes[li + 1]), lambda i: (0, 0)))
            in_specs.append(
                pl.BlockSpec((1, pad_sizes[li + 1]), lambda i: (0, 0)))

        out_p = pl.pallas_call(
            kernel,
            out_shape=jax.ShapeDtypeStruct((B_pad, pad_sizes[-1]), jnp.float32),
            grid=(B_pad // TILE_B,),
            in_specs=in_specs,
            out_specs=pl.BlockSpec((TILE_B, pad_sizes[-1]), lambda i: (i, 0)),
            compiler_params=pltpu.CompilerParams(
                dimension_semantics=("parallel",)),   # 2x on v7x (2 TC/chip)
            cost_estimate=_cost(B_pad),
        )(x_p, *flat_params)

        # De-pad inside the jitted program so the slice fuses with the call.
        return out_p[:B, :sizes[-1]]

    return forward


def init_net_params(key, sizes):
    """Deterministic parameter init mirroring nn.Linear shapes.

    Returns list of (W, b) with W of shape (in, out), b of shape (out,).
    """
    params = []
    for idx in range(1, len(sizes)):
        fan_in, fan_out = sizes[idx - 1], sizes[idx]
        key, wk, bk = jax.random.split(key, 3)
        bound = 1.0 / jnp.sqrt(jnp.float32(fan_in))
        w = jax.random.uniform(
            wk, (fan_in, fan_out), jnp.float32, minval=-bound, maxval=bound)
        b = jax.random.uniform(
            bk, (fan_out,), jnp.float32, minval=-bound, maxval=bound)
        params.append((w, b))
    return params


if __name__ == "__main__":
    # Network spec implied by Net(s, lt): small MLP, softmax head.
    s = [32, 64, 32, 16]
    lt = ["relu", "relu", "softmax"]
    batch = 8   # small demo batch; wrapper tiles/parallelizes larger batches.

    key = jax.random.PRNGKey(0)
    key, xk = jax.random.split(key)
    x = jax.random.normal(xk, (batch, s[0]), jnp.float32)

    params = init_net_params(key, s)

    # One-time prep (padding + bf16 cast + softmax mask baked into bias).
    flat_params, sizes, pad_sizes = prepare_net_params(params, lt)
    net_forward = build_net_forward(lt, sizes, pad_sizes)

    out = net_forward(x, *flat_params)
    out = jax.block_until_ready(out)

    # Reference mirroring the kernel math (bf16 matmul operands, f32 accum).
    ref = x
    for (w, b), t in zip(params, lt):
        y = jnp.dot(ref.astype(jnp.bfloat16), w.astype(jnp.bfloat16),
                    preferred_element_type=jnp.float32) + b
        ref = jnp.maximum(y, 0.0) if t == "relu" else jax.nn.softmax(y, axis=1)

    assert out.shape == (batch, s[-1])
    assert jnp.allclose(out, ref, atol=2e-3, rtol=2e-3), float(
        jnp.max(jnp.abs(out - ref)))
    # Exact-division softmax: rows sum to 1 to float rounding.
    assert jnp.allclose(jnp.sum(out, axis=1), 1.0, atol=1e-3)

    print("KERNEL_OK")
</pallas_src>

<mosaic_0001>
module attributes {stable_mosaic.version = 11 : i64} {
  func.func @_fused_mlp_kernel(%arg0: i32, %arg1: memref<8x128xf32, #tpu.memory_space<vmem>>, %arg2: memref<128x128xbf16, #tpu.memory_space<vmem>>, %arg3: memref<1x128xf32, #tpu.memory_space<vmem>>, %arg4: memref<128x128xbf16, #tpu.memory_space<vmem>>, %arg5: memref<1x128xf32, #tpu.memory_space<vmem>>, %arg6: memref<128x128xbf16, #tpu.memory_space<vmem>>, %arg7: memref<1x128xf32, #tpu.memory_space<vmem>>, %arg8: memref<8x128xf32, #tpu.memory_space<vmem>>) attributes {dimension_semantics = [#tpu.dimension_semantics<parallel>], iteration_bounds = array<i64: 1>, scalar_prefetch = 0 : i64, scratch_operands = 0 : i64, tpu.core_type = #tpu.core_type<tc>, window_params = [{transform_indices = @transform_0, window_bounds = array<i64: 8, 128>}, {pipeline_mode = #tpu.pipeline_mode<synchronous>, transform_indices = @transform_1, window_bounds = array<i64: 128, 128>}, {pipeline_mode = #tpu.pipeline_mode<synchronous>, transform_indices = @transform_2, window_bounds = array<i64: 1, 128>}, {pipeline_mode = #tpu.pipeline_mode<synchronous>, transform_indices = @transform_3, window_bounds = array<i64: 128, 128>}, {pipeline_mode = #tpu.pipeline_mode<synchronous>, transform_indices = @transform_4, window_bounds = array<i64: 1, 128>}, {pipeline_mode = #tpu.pipeline_mode<synchronous>, transform_indices = @transform_5, window_bounds = array<i64: 128, 128>}, {pipeline_mode = #tpu.pipeline_mode<synchronous>, transform_indices = @transform_6, window_bounds = array<i64: 1, 128>}, {transform_indices = @transform_7, window_bounds = array<i64: 8, 128>}]} {
    %c0 = arith.constant 0 : index
    %c0_0 = arith.constant 0 : index
    %0 = vector.load %arg1[%c0, %c0_0] : memref<8x128xf32, #tpu.memory_space<vmem>>, vector<8x128xf32>
    %c0_1 = arith.constant 0 : index
    %c0_2 = arith.constant 0 : index
    %1 = vector.load %arg2[%c0_1, %c0_2] : memref<128x128xbf16, #tpu.memory_space<vmem>>, vector<128x128xbf16>
    %c0_3 = arith.constant 0 : index
    %c0_4 = arith.constant 0 : index
    %2 = vector.load %arg3[%c0_3, %c0_4] : memref<1x128xf32, #tpu.memory_space<vmem>>, vector<1x128xf32>
    %3 = arith.truncf %0 : vector<8x128xf32> to vector<8x128xbf16>
    %cst = arith.constant dense<0.000000e+00> : vector<8x128xf32>
    %4 = tpu.matmul %3, %1, %cst {dimension_numbers = #tpu.dot_dimension_numbers<[1], [0], [0], [1], [0, 0, 1, 1], [], []>} : vector<8x128xbf16>, vector<128x128xbf16>, vector<8x128xf32> -> vector<8x128xf32>
    %5 = vector.broadcast %2 : vector<1x128xf32> to vector<8x128xf32>
    %6 = arith.addf %4, %5 : vector<8x128xf32>
    %cst_5 = arith.constant 0.000000e+00 : f32
    %7 = vector.broadcast %cst_5 : f32 to vector<8x128xf32>
    %8 = arith.maximumf %6, %7 : vector<8x128xf32>
    %c0_6 = arith.constant 0 : index
    %c0_7 = arith.constant 0 : index
    %9 = vector.load %arg4[%c0_6, %c0_7] : memref<128x128xbf16, #tpu.memory_space<vmem>>, vector<128x128xbf16>
    %c0_8 = arith.constant 0 : index
    %c0_9 = arith.constant 0 : index
    %10 = vector.load %arg5[%c0_8, %c0_9] : memref<1x128xf32, #tpu.memory_space<vmem>>, vector<1x128xf32>
    %11 = arith.truncf %8 : vector<8x128xf32> to vector<8x128xbf16>
    %cst_10 = arith.constant dense<0.000000e+00> : vector<8x128xf32>
    %12 = tpu.matmul %11, %9, %cst_10 {dimension_numbers = #tpu.dot_dimension_numbers<[1], [0], [0], [1], [0, 0, 1, 1], [], []>} : vector<8x128xbf16>, vector<128x128xbf16>, vector<8x128xf32> -> vector<8x128xf32>
    %13 = vector.broadcast %10 : vector<1x128xf32> to vector<8x128xf32>
    %14 = arith.addf %12, %13 : vector<8x128xf32>
    %cst_11 = arith.constant 0.000000e+00 : f32
    %15 = vector.broadcast %cst_11 : f32 to vector<8x128xf32>
    %16 = arith.maximumf %14, %15 : vector<8x128xf32>
    %c0_12 = arith.constant 0 : index
    %c0_13 = arith.constant 0 : index
    %17 = vector.load %arg6[%c0_12, %c0_13] : memref<128x128xbf16, #tpu.memory_space<vmem>>, vector<128x128xbf16>
    %c0_14 = arith.constant 0 : index
    %c0_15 = arith.constant 0 : index
    %18 = vector.load %arg7[%c0_14, %c0_15] : memref<1x128xf32, #tpu.memory_space<vmem>>, vector<1x128xf32>
    %19 = arith.truncf %16 : vector<8x128xf32> to vector<8x128xbf16>
    %cst_16 = arith.constant dense<0.000000e+00> : vector<8x128xf32>
    %20 = tpu.matmul %19, %17, %cst_16 {dimension_numbers = #tpu.dot_dimension_numbers<[1], [0], [0], [1], [0, 0, 1, 1], [], []>} : vector<8x128xbf16>, vector<128x128xbf16>, vector<8x128xf32> -> vector<8x128xf32>
    %21 = vector.broadcast %18 : vector<1x128xf32> to vector<8x128xf32>
    %22 = arith.addf %20, %21 : vector<8x128xf32>
    %cst_17 = arith.constant dense<0xFF800000> : vector<8xf32>
    %23 = vector.multi_reduction <maximumf>, %22, %cst_17 [1] : vector<8x128xf32> to vector<8xf32>
    %24 = vector.shape_cast %23 : vector<8xf32> to vector<8x1xf32>
    %25 = vector.broadcast %24 : vector<8x1xf32> to vector<8x128xf32>
    %26 = arith.subf %22, %25 : vector<8x128xf32>
    %27 = math.exp %26 : vector<8x128xf32>
    %cst_18 = arith.constant dense<0.000000e+00> : vector<8xf32>
    %28 = vector.multi_reduction <add>, %27, %cst_18 [1] : vector<8x128xf32> to vector<8xf32>
    %29 = vector.shape_cast %28 : vector<8xf32> to vector<8x1xf32>
    %30 = vector.broadcast %29 : vector<8x1xf32> to vector<8x128xf32>
    %31 = arith.divf %27, %30 : vector<8x128xf32>
    %c0_19 = arith.constant 0 : index
    %c0_20 = arith.constant 0 : index
    %32 = vector.load %arg8[%c0_19, %c0_20] : memref<8x128xf32, #tpu.memory_space<vmem>>, vector<8x128xf32>
    tpu.vector_store %arg8[%c0_19, %c0_20], %31 {strides = array<i32>} : memref<8x128xf32, #tpu.memory_space<vmem>>, vector<8x128xf32>,
    return
  }
  func.func @transform_0(%arg0: i32) -> (i32, i32) {
    %c0_i32 = arith.constant 0 : i32
    %c0_i32_0 = arith.constant 0 : i32
    return %arg0, %c0_i32 : i32, i32
  }
  func.func @transform_1(%arg0: i32) -> (i32, i32) {
    %c0_i32 = arith.constant 0 : i32
    %c0_i32_0 = arith.constant 0 : i32
    %c0_i32_1 = arith.constant 0 : i32
    return %c0_i32, %c0_i32_0 : i32, i32
  }
  func.func @transform_2(%arg0: i32) -> (i32, i32) {
    %c0_i32 = arith.constant 0 : i32
    %c0_i32_0 = arith.constant 0 : i32
    %c0_i32_1 = arith.constant 0 : i32
    return %c0_i32, %c0_i32_0 : i32, i32
  }
  func.func @transform_3(%arg0: i32) -> (i32, i32) {
    %c0_i32 = arith.constant 0 : i32
    %c0_i32_0 = arith.constant 0 : i32
    %c0_i32_1 = arith.constant 0 : i32
    return %c0_i32, %c0_i32_0 : i32, i32
  }
  func.func @transform_4(%arg0: i32) -> (i32, i32) {
    %c0_i32 = arith.constant 0 : i32
    %c0_i32_0 = arith.constant 0 : i32
    %c0_i32_1 = arith.constant 0 : i32
    return %c0_i32, %c0_i32_0 : i32, i32
  }
  func.func @transform_5(%arg0: i32) -> (i32, i32) {
    %c0_i32 = arith.constant 0 : i32
    %c0_i32_0 = arith.constant 0 : i32
    %c0_i32_1 = arith.constant 0 : i32
    return %c0_i32, %c0_i32_0 : i32, i32
  }
  func.func @transform_6(%arg0: i32) -> (i32, i32) {
    %c0_i32 = arith.constant 0 : i32
    %c0_i32_0 = arith.constant 0 : i32
    %c0_i32_1 = arith.constant 0 : i32
    return %c0_i32, %c0_i32_0 : i32, i32
  }
  func.func @transform_7(%arg0: i32) -> (i32, i32) {
    %c0_i32 = arith.constant 0 : i32
    %c0_i32_0 = arith.constant 0 : i32
    return %arg0, %c0_i32 : i32, i32
  }
}

</mosaic_0001>

<llo_original>
// kernel: forward.1
$region0: #{forward.1}
  #allocation0 [shape = 'u32[]', space=smem, size = 0x4, offset = 0x4, fixed_abs, tag = 'smem constant byte address 0x4 - core index']
  #allocation1 [shape = 'u32[144,128]{1,0:T(1,128)}', space=vmem, size = 0x12000, scoped, tag = 'internal scratch']
  %s0 = inlined_call_operand.vmem [shape: f32[8,128], index: 0, kind: input, shape index: {}]
  %s1 = inlined_call_operand.hbm [shape: bf16[128,128], index: 1, kind: input, shape index: {}]
  %s2 = inlined_call_operand.vmem [shape: f32[1,128], index: 2, kind: input, shape index: {}]
  %s3 = inlined_call_operand.hbm [shape: bf16[128,128], index: 3, kind: input, shape index: {}]
  %s4 = inlined_call_operand.vmem [shape: f32[1,128], index: 4, kind: input, shape index: {}]
  %s5 = inlined_call_operand.hbm [shape: bf16[128,128], index: 5, kind: input, shape index: {}]
  %s6 = inlined_call_operand.vmem [shape: f32[1,128], index: 6, kind: input, shape index: {}]
  %s7 = inlined_call_operand.hbm [shape: f32[8,128], index: 7, kind: output, shape index: {}]
  %s8 = sld [smem:[#allocation0]]
  $region50: #{forward.1} parent=0
    _
  %s10 = ssub.s32 1, %s8
  %s11 = scalar_select 0, %s10, %s8
  $region1: #{forward.1} parent=0
    #allocation2 [shape = 'u8[32768]{0}', space=vmem, size = 0x8000, scoped, tag = 'input window, operand 1, single buffered']
    #allocation3 [shape = 's32[1]{0}', space=sflag, size = 0x4, scoped, tag = 'scoped memory for forward.1']
    #allocation4 [shape = 's32[1]{0}', space=sflag, size = 0x4, scoped, tag = 'scoped memory for forward.1']
    #allocation5 [shape = 'u8[32768]{0}', space=vmem, size = 0x8000, scoped, tag = 'input window, operand 3, single buffered']
    #allocation6 [shape = 's32[1]{0}', space=sflag, size = 0x4, scoped, tag = 'scoped memory for forward.1']
    #allocation7 [shape = 'u8[32768]{0}', space=vmem, size = 0x8000, scoped, tag = 'input window, operand 5, single buffered']
    #allocation8 [shape = 'u8[4096]{0}', space=vmem, size = 0x1000, scoped, tag = 'output window, operand 0, single buffered']
    %12 = vsyncpa [#allocation3], 0
    %13 = vsyncpa [#allocation6], 0
    %14 = vsyncpa [#allocation4], 0
    // Predicated region
    $region2: #{forward.1} parent=1 // pred_check
      _
    $region3: #{forward.1} parent=1 // pred_check_branch
      %16 = sbr.rel (0) target = $region5
    $region4: #{forward.1} parent=1 // pred_region
      _
    $region5: #{forward.1} parent=1 // pred_fallthru
      _
    // Predicated region
    $region6: #{forward.1} parent=1 // pred_check
      _
    $region7: #{forward.1} parent=1 // pred_check_branch
      %18 = sbr.rel (0) target = $region9
    $region8: #{forward.1} parent=1 // pred_region
      %s20 = ssub.s32 1024, 1024
      %21 = vsyncadd [#allocation3], %s20
      %s22 = sshll.u32 [#allocation2], 4
      %s23 = int_to_ptr.vmem [resolvable:$true] %s22
      %28 = dma.hbm_to_vmem [thread:$0]  %s1, 1024, %s23, [#allocation3], 64, 64, 4
    $region9: #{forward.1} parent=1 // pred_fallthru
      _
    // Predicated region
    $region10: #{forward.1} parent=1 // pred_check
      _
    $region11: #{forward.1} parent=1 // pred_check_branch
      %30 = sbr.rel (0) target = $region13
    $region12: #{forward.1} parent=1 // pred_region
      _
    $region13: #{forward.1} parent=1 // pred_fallthru
      _
    // Predicated region
    $region14: #{forward.1} parent=1 // pred_check
      _
    $region15: #{forward.1} parent=1 // pred_check_branch
      %32 = sbr.rel (0) target = $region17
    $region16: #{forward.1} parent=1 // pred_region
      %s34 = ssub.s32 1024, 1024
      %35 = vsyncadd [#allocation6], %s34
      %s36 = sshll.u32 [#allocation5], 4
      %s37 = int_to_ptr.vmem [resolvable:$true] %s36
      %42 = dma.hbm_to_vmem [thread:$0]  %s3, 1024, %s37, [#allocation6], 64, 64, 4
    $region17: #{forward.1} parent=1 // pred_fallthru
      _
    // Predicated region
    $region18: #{forward.1} parent=1 // pred_check
      _
    $region19: #{forward.1} parent=1 // pred_check_branch
      %44 = sbr.rel (0) target = $region21
    $region20: #{forward.1} parent=1 // pred_region
      _
    $region21: #{forward.1} parent=1 // pred_fallthru
      _
    // Predicated region
    $region22: #{forward.1} parent=1 // pred_check
      _
    $region23: #{forward.1} parent=1 // pred_check_branch
      %46 = sbr.rel (0) target = $region25
    $region24: #{forward.1} parent=1 // pred_region
      %s48 = ssub.s32 1024, 1024
      %49 = vsyncadd [#allocation6], %s48
      %s50 = sshll.u32 [#allocation7], 4
      %s51 = int_to_ptr.vmem [resolvable:$true] %s50
      %56 = dma.hbm_to_vmem [thread:$0]  %s5, 1024, %s51, [#allocation6], 64, 64, 4
    $region25: #{forward.1} parent=1 // pred_fallthru
      _
    // Predicated region
    $region26: #{forward.1} parent=1 // pred_check
      _
    $region27: #{forward.1} parent=1 // pred_check_branch
      %58 = sbr.rel (0) target = $region29
    $region28: #{forward.1} parent=1 // pred_region
      _
    $region29: #{forward.1} parent=1 // pred_fallthru
      _
    // Predicated region
    $region30: #{forward.1} parent=1 // pred_check
      _
    $region31: #{forward.1} parent=1 // pred_check_branch
      %60 = sbr.rel (0) target = $region33
    $region32: #{forward.1} parent=1 // pred_region
      %61 = dma.done [#allocation3], 1024
    $region33: #{forward.1} parent=1 // pred_fallthru
      _
    // Predicated region
    $region34: #{forward.1} parent=1 // pred_check
      _
    $region35: #{forward.1} parent=1 // pred_check_branch
      %63 = sbr.rel (0) target = $region37
    $region36: #{forward.1} parent=1 // pred_region
      %64 = dma.done [#allocation6], 1024
    $region37: #{forward.1} parent=1 // pred_fallthru
      _
    // Predicated region
    $region38: #{forward.1} parent=1 // pred_check
      _
    $region39: #{forward.1} parent=1 // pred_check_branch
      %66 = sbr.rel (0) target = $region41
    $region40: #{forward.1} parent=1 // pred_region
      %67 = dma.done [#allocation6], 1024
    $region41: #{forward.1} parent=1 // pred_fallthru
      _
    %v69 = vld [vmem:[%s0] sm:$0xff]
    %v70 = vld [vmem:[#allocation2] sm:$0xf]
    %v71 = vld [vmem:[#allocation2 + $0x4] sm:$0xf]
    %v72 = vld [vmem:[#allocation2 + $0x8] sm:$0xf]
    %v73 = vld [vmem:[#allocation2 + $0xc] sm:$0xf]
    %v74 = vld [vmem:[#allocation2 + $0x10] sm:$0xf]
    %v75 = vld [vmem:[#allocation2 + $0x14] sm:$0xf]
    %v76 = vld [vmem:[#allocation2 + $0x18] sm:$0xf]
    %v77 = vld [vmem:[#allocation2 + $0x1c] sm:$0xf]
    %v78 = vld [vmem:[#allocation2 + $0x20] sm:$0xf]
    %v79 = vld [vmem:[#allocation2 + $0x24] sm:$0xf]
    %v80 = vld [vmem:[#allocation2 + $0x28] sm:$0xf]
    %v81 = vld [vmem:[#allocation2 + $0x2c] sm:$0xf]
    %v82 = vld [vmem:[#allocation2 + $0x30] sm:$0xf]
    %v83 = vld [vmem:[#allocation2 + $0x34] sm:$0xf]
    %v84 = vld [vmem:[#allocation2 + $0x38] sm:$0xf]
    %v85 = vld [vmem:[#allocation2 + $0x3c] sm:$0xf]
    %v86 = vld [vmem:[%s2] sm:$0x1]
    %v87 = vpack.c.bf16 %v69, %v69
    %v89 = vlaneseq
    %v90 = vshrl.u32 %v89, 7
    %v91 = vsub.s32 0, %v90
    %v92 = vrot.slane %v86, %v91
    %v110 = vunpack.c.l.b16 %v70
    %v111 = vunpack.c.l.b16 %v71
    %v112 = vunpack.c.l.b16 %v72
    %v113 = vunpack.c.l.b16 %v73
    %v114 = vunpack.c.l.b16 %v74
    %v115 = vunpack.c.l.b16 %v75
    %v116 = vunpack.c.l.b16 %v76
    %v117 = vunpack.c.l.b16 %v77
    %v118 = vunpack.c.l.b16 %v78
    %v119 = vunpack.c.l.b16 %v79
    %v120 = vunpack.c.l.b16 %v80
    %v121 = vunpack.c.l.b16 %v81
    %v122 = vunpack.c.l.b16 %v82
    %v123 = vunpack.c.l.b16 %v83
    %v124 = vunpack.c.l.b16 %v84
    %v125 = vunpack.c.l.b16 %v85
    %v126 = vpack.c.b16 %v111, %v110
    %v127 = vpack.c.b16 %v113, %v112
    %v128 = vpack.c.b16 %v115, %v114
    %v129 = vpack.c.b16 %v117, %v116
    %v130 = vpack.c.b16 %v119, %v118
    %v131 = vpack.c.b16 %v121, %v120
    %v132 = vpack.c.b16 %v123, %v122
    %v133 = vpack.c.b16 %v125, %v124
    %142 = vmatprep.subr.bf16.mxu0 0
    %143 = vmatpush1.bf16.msra.mxu0 %v126
    %144 = vmatprep.subr.bf16.mxu0 0
    %145 = vmatpush1.bf16.msra.mxu0 %v127
    %146 = vmatprep.subr.bf16.mxu0 0
    %147 = vmatpush1.bf16.msra.mxu0 %v128
    %148 = vmatprep.subr.bf16.mxu0 0
    %149 = vmatpush1.bf16.msra.mxu0 %v129
    %150 = vmatprep.subr.bf16.mxu0 0
    %151 = vmatpush1.bf16.msra.mxu0 %v130
    %152 = vmatprep.subr.bf16.mxu0 0
    %153 = vmatpush1.bf16.msra.mxu0 %v131
    %154 = vmatprep.subr.bf16.mxu0 0
    %155 = vmatpush1.bf16.msra.mxu0 %v132
    %156 = vmatprep.subr.bf16.mxu0 0
    %157 = vmatpush1.bf16.msra.mxu0 %v133
    %158 = vmatprep.subr.bf16.mxu0 0
    %159 = vmatpush1.bf16.msra.mxu0 0
    %160 = vmatprep.subr.bf16.mxu0 0
    %161 = vmatpush1.bf16.msra.mxu0 0
    %162 = vmatprep.subr.bf16.mxu0 0
    %163 = vmatpush1.bf16.msra.mxu0 0
    %164 = vmatprep.subr.bf16.mxu0 0
    %165 = vmatpush1.bf16.msra.mxu0 0
    %166 = vmatprep.subr.bf16.mxu0 0
    %167 = vmatpush1.bf16.msra.mxu0 0
    %168 = vmatprep.subr.bf16.mxu0 0
    %169 = vmatpush1.bf16.msra.mxu0 0
    %170 = vmatprep.subr.bf16.mxu0 0
    %171 = vmatpush1.bf16.msra.mxu0 0
    %172 = vmatprep.subr.bf16.mxu0 0
    %173 = vmatpush1.bf16.msra.mxu0 0
    %174 = vmatprep.mubr.bf16.mxu0 0
    %175 = vmatmul.mubr.bf16.gmra.mrb[0].mxu0 %v87
    %v176 = vpop.f32.mrb[0].mxu0
    %v177 = vadd.f32 %v92, %v176
    %v178 = vpop.f32.mrb[0].mxu0
    %v179 = vpop.f32.mrb[0].mxu0
    %v180 = vpop.f32.mrb[0].mxu0
    %181 = vdwg.mxu0
    %v182 = vmax.f32 %v177, 0.0
    %v183 = vld [vmem:[#allocation5] sm:$0xf]
    %v184 = vld [vmem:[#allocation5 + $0x4] sm:$0xf]
    %v185 = vld [vmem:[#allocation5 + $0x8] sm:$0xf]
    %v186 = vld [vmem:[#allocation5 + $0xc] sm:$0xf]
    %v187 = vld [vmem:[#allocation5 + $0x10] sm:$0xf]
    %v188 = vld [vmem:[#allocation5 + $0x14] sm:$0xf]
    %v189 = vld [vmem:[#allocation5 + $0x18] sm:$0xf]
    %v190 = vld [vmem:[#allocation5 + $0x1c] sm:$0xf]
    %v191 = vld [vmem:[#allocation5 + $0x20] sm:$0xf]
    %v192 = vld [vmem:[#allocation5 + $0x24] sm:$0xf]
    %v193 = vld [vmem:[#allocation5 + $0x28] sm:$0xf]
    %v194 = vld [vmem:[#allocation5 + $0x2c] sm:$0xf]
    %v195 = vld [vmem:[#allocation5 + $0x30] sm:$0xf]
    %v196 = vld [vmem:[#allocation5 + $0x34] sm:$0xf]
    %v197 = vld [vmem:[#allocation5 + $0x38] sm:$0xf]
    %v198 = vld [vmem:[#allocation5 + $0x3c] sm:$0xf]
    %v199 = vld [vmem:[%s4] sm:$0x1]
    %v200 = vpack.c.bf16 %v182, %v182
    %v202 = vlaneseq
    %v203 = vshrl.u32 %v202, 7
    %v204 = vsub.s32 0, %v203
    %v205 = vrot.slane %v199, %v204
    %v223 = vunpack.c.l.b16 %v183
    %v224 = vunpack.c.l.b16 %v184
    %v225 = vunpack.c.l.b16 %v185
    %v226 = vunpack.c.l.b16 %v186
    %v227 = vunpack.c.l.b16 %v187
    %v228 = vunpack.c.l.b16 %v188
    %v229 = vunpack.c.l.b16 %v189
    %v230 = vunpack.c.l.b16 %v190
    %v231 = vunpack.c.l.b16 %v191
    %v232 = vunpack.c.l.b16 %v192
    %v233 = vunpack.c.l.b16 %v193
    %v234 = vunpack.c.l.b16 %v194
    %v235 = vunpack.c.l.b16 %v195
    %v236 = vunpack.c.l.b16 %v196
    %v237 = vunpack.c.l.b16 %v197
    %v238 = vunpack.c.l.b16 %v198
    %v239 = vpack.c.b16 %v224, %v223
    %v240 = vpack.c.b16 %v226, %v225
    %v241 = vpack.c.b16 %v228, %v227
    %v242 = vpack.c.b16 %v230, %v229
    %v243 = vpack.c.b16 %v232, %v231
    %v244 = vpack.c.b16 %v234, %v233
    %v245 = vpack.c.b16 %v236, %v235
    %v246 = vpack.c.b16 %v238, %v237
    %255 = vmatprep.subr.bf16.mxu0 0
    %256 = vmatpush1.bf16.msra.mxu0 %v239
    %257 = vmatprep.subr.bf16.mxu0 0
    %258 = vmatpush1.bf16.msra.mxu0 %v240
    %259 = vmatprep.subr.bf16.mxu0 0
    %260 = vmatpush1.bf16.msra.mxu0 %v241
    %261 = vmatprep.subr.bf16.mxu0 0
    %262 = vmatpush1.bf16.msra.mxu0 %v242
    %263 = vmatprep.subr.bf16.mxu0 0
    %264 = vmatpush1.bf16.msra.mxu0 %v243
    %265 = vmatprep.subr.bf16.mxu0 0
    %266 = vmatpush1.bf16.msra.mxu0 %v244
    %267 = vmatprep.subr.bf16.mxu0 0
    %268 = vmatpush1.bf16.msra.mxu0 %v245
    %269 = vmatprep.subr.bf16.mxu0 0
    %270 = vmatpush1.bf16.msra.mxu0 %v246
    %271 = vmatprep.subr.bf16.mxu0 0
    %272 = vmatpush1.bf16.msra.mxu0 0
    %273 = vmatprep.subr.bf16.mxu0 0
    %274 = vmatpush1.bf16.msra.mxu0 0
    %275 = vmatprep.subr.bf16.mxu0 0
    %276 = vmatpush1.bf16.msra.mxu0 0
    %277 = vmatprep.subr.bf16.mxu0 0
    %278 = vmatpush1.bf16.msra.mxu0 0
    %279 = vmatprep.subr.bf16.mxu0 0
    %280 = vmatpush1.bf16.msra.mxu0 0
    %281 = vmatprep.subr.bf16.mxu0 0
    %282 = vmatpush1.bf16.msra.mxu0 0
    %283 = vmatprep.subr.bf16.mxu0 0
    %284 = vmatpush1.bf16.msra.mxu0 0
    %285 = vmatprep.subr.bf16.mxu0 0
    %286 = vmatpush1.bf16.msra.mxu0 0
    %287 = vmatprep.mubr.bf16.mxu0 0
    %288 = vmatmul.mubr.bf16.gmra.mrb[0].mxu0 %v200
    %v289 = vpop.f32.mrb[0].mxu0
    %v290 = vadd.f32 %v205, %v289
    %v291 = vpop.f32.mrb[0].mxu0
    %v292 = vpop.f32.mrb[0].mxu0
    %v293 = vpop.f32.mrb[0].mxu0
    %294 = vdwg.mxu0
    %v295 = vmax.f32 %v290, 0.0
    %v296 = vld [vmem:[#allocation7] sm:$0xf]
    %v297 = vld [vmem:[#allocation7 + $0x4] sm:$0xf]
    %v298 = vld [vmem:[#allocation7 + $0x8] sm:$0xf]
    %v299 = vld [vmem:[#allocation7 + $0xc] sm:$0xf]
    %v300 = vld [vmem:[#allocation7 + $0x10] sm:$0xf]
    %v301 = vld [vmem:[#allocation7 + $0x14] sm:$0xf]
    %v302 = vld [vmem:[#allocation7 + $0x18] sm:$0xf]
    %v303 = vld [vmem:[#allocation7 + $0x1c] sm:$0xf]
    %v304 = vld [vmem:[#allocation7 + $0x20] sm:$0xf]
    %v305 = vld [vmem:[#allocation7 + $0x24] sm:$0xf]
    %v306 = vld [vmem:[#allocation7 + $0x28] sm:$0xf]
    %v307 = vld [vmem:[#allocation7 + $0x2c] sm:$0xf]
    %v308 = vld [vmem:[#allocation7 + $0x30] sm:$0xf]
    %v309 = vld [vmem:[#allocation7 + $0x34] sm:$0xf]
    %v310 = vld [vmem:[#allocation7 + $0x38] sm:$0xf]
    %v311 = vld [vmem:[#allocation7 + $0x3c] sm:$0xf]
    %v312 = vld [vmem:[%s6] sm:$0x1]
    %v313 = vpack.c.bf16 %v295, %v295
    %v315 = vlaneseq
    %v316 = vshrl.u32 %v315, 7
    %v317 = vsub.s32 0, %v316
    %v318 = vrot.slane %v312, %v317
    %v336 = vunpack.c.l.b16 %v296
    %v337 = vunpack.c.l.b16 %v297
    %v338 = vunpack.c.l.b16 %v298
    %v339 = vunpack.c.l.b16 %v299
    %v340 = vunpack.c.l.b16 %v300
    %v341 = vunpack.c.l.b16 %v301
    %v342 = vunpack.c.l.b16 %v302
    %v343 = vunpack.c.l.b16 %v303
    %v344 = vunpack.c.l.b16 %v304
    %v345 = vunpack.c.l.b16 %v305
    %v346 = vunpack.c.l.b16 %v306
    %v347 = vunpack.c.l.b16 %v307
    %v348 = vunpack.c.l.b16 %v308
    %v349 = vunpack.c.l.b16 %v309
    %v350 = vunpack.c.l.b16 %v310
    %v351 = vunpack.c.l.b16 %v311
    %v352 = vpack.c.b16 %v337, %v336
    %v353 = vpack.c.b16 %v339, %v338
    %v354 = vpack.c.b16 %v341, %v340
    %v355 = vpack.c.b16 %v343, %v342
    %v356 = vpack.c.b16 %v345, %v344
    %v357 = vpack.c.b16 %v347, %v346
    %v358 = vpack.c.b16 %v349, %v348
    %v359 = vpack.c.b16 %v351, %v350
    %368 = vmatprep.subr.bf16.mxu0 0
    %369 = vmatpush1.bf16.msra.mxu0 %v352
    %370 = vmatprep.subr.bf16.mxu0 0
    %371 = vmatpush1.bf16.msra.mxu0 %v353
    %372 = vmatprep.subr.bf16.mxu0 0
    %373 = vmatpush1.bf16.msra.mxu0 %v354
    %374 = vmatprep.subr.bf16.mxu0 0
    %375 = vmatpush1.bf16.msra.mxu0 %v355
    %376 = vmatprep.subr.bf16.mxu0 0
    %377 = vmatpush1.bf16.msra.mxu0 %v356
    %378 = vmatprep.subr.bf16.mxu0 0
    %379 = vmatpush1.bf16.msra.mxu0 %v357
    %380 = vmatprep.subr.bf16.mxu0 0
    %381 = vmatpush1.bf16.msra.mxu0 %v358
    %382 = vmatprep.subr.bf16.mxu0 0
    %383 = vmatpush1.bf16.msra.mxu0 %v359
    %384 = vmatprep.subr.bf16.mxu0 0
    %385 = vmatpush1.bf16.msra.mxu0 0
    %386 = vmatprep.subr.bf16.mxu0 0
    %387 = vmatpush1.bf16.msra.mxu0 0
    %388 = vmatprep.subr.bf16.mxu0 0
    %389 = vmatpush1.bf16.msra.mxu0 0
    %390 = vmatprep.subr.bf16.mxu0 0
    %391 = vmatpush1.bf16.msra.mxu0 0
    %392 = vmatprep.subr.bf16.mxu0 0
    %393 = vmatpush1.bf16.msra.mxu0 0
    %394 = vmatprep.subr.bf16.mxu0 0
    %395 = vmatpush1.bf16.msra.mxu0 0
    %396 = vmatprep.subr.bf16.mxu0 0
    %397 = vmatpush1.bf16.msra.mxu0 0
    %398 = vmatprep.subr.bf16.mxu0 0
    %399 = vmatpush1.bf16.msra.mxu0 0
    %400 = vmatprep.mubr.bf16.mxu0 0
    %401 = vmatmul.mubr.bf16.gmra.mrb[0].mxu0 %v313
    %v402 = vpop.f32.mrb[0].mxu0
    %v403 = vadd.f32 %v318, %v402
    %v404 = vpop.f32.mrb[0].mxu0
    %v405 = vpop.f32.mrb[0].mxu0
    %v406 = vpop.f32.mrb[0].mxu0
    %407 = vdwg.mxu0
    %408 = vmax.xlane.f32.xlu0 %v403
    %v409 = vpop.xlane.xlu0 %408
    %v410 = vsub.f32 %v403, %v409
    %v411 = vmul.f32 %v410, 1.442695
    %v412 = vpow.pop %v411
    %413 = vadd.xlane.f32.xlu0 %v412
    %v414 = vpop.xlane.xlu0 %413
    %v415 = vrcp.pop %v414
    %v416 = vmul.f32 %v412, %v415
    %417 = vst [vmem:[#allocation8] sm:$0xff] %v416
    // Predicated region
    $region42: #{forward.1} parent=1 // pred_check
      _
    $region43: #{forward.1} parent=1 // pred_check_branch
      %419 = sbr.rel (0) target = $region45
    $region44: #{forward.1} parent=1 // pred_region
      %s421 = ssub.s32 128, 128
      %422 = vsyncadd [#allocation4], %s421
      %s424 = sshll.u32 [#allocation8], 4
      %s425 = int_to_ptr.vmem [resolvable:$true] %s424
      %427 = dma.vmem_to_hbm [thread:$0]  %s425, 128, %s7, [#allocation4]
    $region45: #{forward.1} parent=1 // pred_fallthru
      _
    // Predicated region
    $region46: #{forward.1} parent=1 // pred_check
      _
    $region47: #{forward.1} parent=1 // pred_check_branch
      %429 = sbr.rel (0) target = $region49
    $region48: #{forward.1} parent=1 // pred_region
      %430 = dma.done [#allocation4], 128
    $region49: #{forward.1} parent=1 // pred_fallthru
      _
    %431 = vsyncpa [#allocation3], 1
    %432 = vsyncpa [#allocation6], 1
    %433 = vsyncpa [#allocation4], 1

</llo_original>
